<compile_context>
chip_gen: v6e
topology: v6e:2x2x1
jax: 0.10.0
libtpu: 0.0.40
codegen_flags: <defaults>
</compile_context>

<pallas_src>
import jax
import jax.numpy as jnp
from jax import lax
from jax.experimental import pallas as pl
from jax.experimental.pallas import tpu as pltpu


def _pick_wb(w, bytes_per_w, max_block_bytes=1 << 20):
    """Largest divisor of `w` that (a) keeps one block under `max_block_bytes`,
    (b) is <= 64 (bounded static unroll), and (c) leaves >= 2 grid steps when
    possible so the BlockSpec pipeline can double-buffer."""
    cap = min(64, max(1, w // 2), max(1, max_block_bytes // max(1, bytes_per_w)))
    best = 1
    for d in range(1, w + 1):
        if w % d == 0 and d <= cap:
            best = d
    return best


def _hflip_block_kernel(img_ref, lab_ref, img_out_ref, lab_out_ref):
    # Block layout: (WB, C, H) / (WB, Cl, H).  The coarse reversal (block order
    # along W) is already done by the mirrored input index_map; here we only
    # reverse the WB rows inside one block.  Each statement is one contiguous,
    # lane-dense (C, H) slab copy (H is the lane axis), so this is <= 64
    # vectorized slab copies, not W masked per-column stores.
    wb = img_ref.shape[0]
    for w in range(wb):
        img_out_ref[w] = img_ref[wb - 1 - w]
        lab_out_ref[w] = lab_ref[wb - 1 - w]


def _hflip_pallas(img, lab):
    """Reverse img and lab along axis 1 (W) with a Pallas TPU kernel."""
    H, W, C = img.shape
    Hl, Wl, Cl = lab.shape
    assert (H, W) == (Hl, Wl), "img and label must share spatial dims"

    # Lane-dense layout: W becomes the leading (grid) axis, H the lane axis.
    img_t = jnp.transpose(img, (1, 2, 0))   # (W, C, H)
    lab_t = jnp.transpose(lab, (1, 2, 0))   # (W, Cl, H)

    bytes_per_w = C * H * img.dtype.itemsize + Cl * H * lab.dtype.itemsize
    wb = _pick_wb(W, bytes_per_w)
    n_wb = W // wb

    img_out_t, lab_out_t = pl.pallas_call(
        _hflip_block_kernel,
        out_shape=(
            jax.ShapeDtypeStruct(img_t.shape, img_t.dtype),
            jax.ShapeDtypeStruct(lab_t.shape, lab_t.dtype),
        ),
        grid=(n_wb,),
        in_specs=[
            # Mirrored block fetch: output block j reads input block n_wb-1-j,
            # so most of the reversal is pure DMA addressing.
            pl.BlockSpec((wb, C, H), lambda j: (n_wb - 1 - j, 0, 0)),
            pl.BlockSpec((wb, Cl, H), lambda j: (n_wb - 1 - j, 0, 0)),
        ],
        out_specs=(
            pl.BlockSpec((wb, C, H), lambda j: (j, 0, 0)),
            pl.BlockSpec((wb, Cl, H), lambda j: (j, 0, 0)),
        ),
        compiler_params=pltpu.CompilerParams(
            dimension_semantics=("parallel",),
        ),
    )(img_t, lab_t)

    # Undo the layout change outside the kernel.
    img_out = jnp.transpose(img_out_t, (2, 0, 1))   # back to (H, W, C)
    lab_out = jnp.transpose(lab_out_t, (2, 0, 1))
    return img_out, lab_out


def random_hflip(img, lab, key, p=0.5):
    """JAX/Pallas equivalent of RandomHFlip(p).forward(img, label).

    PyTorch flips iff np.random.rand(1) > p, i.e. with probability (1 - p).
    The no-flip case skips the kernel entirely (lax.cond), so it costs no
    HBM traffic at all.
    """
    # TODO(synk): the original draws host-side numpy randomness; here the gate
    # comes from jax.random so the op stays traceable/device-side.
    do_flip = jax.random.uniform(key, ()) > p
    return lax.cond(
        do_flip,
        lambda ops: _hflip_pallas(*ops),
        lambda ops: ops,
        (img, lab),
    )


if __name__ == "__main__":
    key = jax.random.PRNGKey(0)
    k_img, k_lab, k_flip = jax.random.split(key, 3)

    H, W, C = 16, 16, 4          # small HWC image
    img = jax.random.normal(k_img, (H, W, C), dtype=jnp.float32)
    lab = jax.random.randint(k_lab, (H, W, 1), 0, 5).astype(jnp.int32)

    # 1) Always-flip path: guarantees the Pallas kernel actually executes.
    img_f, lab_f = _hflip_pallas(img, lab)
    jax.block_until_ready((img_f, lab_f))
    assert jnp.array_equal(img_f, img[:, ::-1, :]), "flipped img mismatch"
    assert jnp.array_equal(lab_f, lab[:, ::-1, :]), "flipped label mismatch"

    # 2) Full RandomHFlip semantics with the random gate.
    img_out, lab_out = random_hflip(img, lab, k_flip, p=0.5)
    jax.block_until_ready((img_out, lab_out))

    flip = bool(jax.random.uniform(k_flip, ()) > 0.5)
    ref_img = img[:, ::-1, :] if flip else img
    ref_lab = lab[:, ::-1, :] if flip else lab
    assert jnp.array_equal(img_out, ref_img), "img mismatch"
    assert jnp.array_equal(lab_out, ref_lab), "label mismatch"

    print("KERNEL_OK")
</pallas_src>

<mosaic_0001>
module attributes {stable_mosaic.version = 11 : i64} {
  func.func @_hflip_block_kernel(%arg0: i32, %arg1: memref<8x4x16xf32, #tpu.memory_space<vmem>>, %arg2: memref<8x1x16xi32, #tpu.memory_space<vmem>>, %arg3: memref<8x4x16xf32, #tpu.memory_space<vmem>>, %arg4: memref<8x1x16xi32, #tpu.memory_space<vmem>>) attributes {dimension_semantics = [#tpu.dimension_semantics<parallel>], iteration_bounds = array<i64: 2>, scalar_prefetch = 0 : i64, scratch_operands = 0 : i64, tpu.core_type = #tpu.core_type<tc>, window_params = [{transform_indices = @transform_0, window_bounds = array<i64: 8, 4, 16>}, {transform_indices = @transform_1, window_bounds = array<i64: 8, 1, 16>}, {transform_indices = @transform_2, window_bounds = array<i64: 8, 4, 16>}, {transform_indices = @transform_3, window_bounds = array<i64: 8, 1, 16>}]} {
    %c7 = arith.constant 7 : index
    %c0 = arith.constant 0 : index
    %c0_0 = arith.constant 0 : index
    %0 = vector.load %arg1[%c7, %c0, %c0_0] : memref<8x4x16xf32, #tpu.memory_space<vmem>>, vector<1x4x16xf32>
    %1 = vector.shape_cast %0 : vector<1x4x16xf32> to vector<4x16xf32>
    %c0_1 = arith.constant 0 : index
    %c0_2 = arith.constant 0 : index
    %c0_3 = arith.constant 0 : index
    %2 = vector.load %arg3[%c0_1, %c0_2, %c0_3] : memref<8x4x16xf32, #tpu.memory_space<vmem>>, vector<1x4x16xf32>
    %3 = vector.shape_cast %2 : vector<1x4x16xf32> to vector<4x16xf32>
    %4 = vector.shape_cast %1 : vector<4x16xf32> to vector<1x4x16xf32>
    tpu.vector_store %arg3[%c0_1, %c0_2, %c0_3], %4 {strides = array<i32>} : memref<8x4x16xf32, #tpu.memory_space<vmem>>, vector<1x4x16xf32>,
    %c7_4 = arith.constant 7 : index
    %c0_5 = arith.constant 0 : index
    %c0_6 = arith.constant 0 : index
    %5 = vector.load %arg2[%c7_4, %c0_5, %c0_6] : memref<8x1x16xi32, #tpu.memory_space<vmem>>, vector<1x1x16xi32>
    %6 = vector.shape_cast %5 : vector<1x1x16xi32> to vector<1x16xi32>
    %c0_7 = arith.constant 0 : index
    %c0_8 = arith.constant 0 : index
    %c0_9 = arith.constant 0 : index
    %7 = vector.load %arg4[%c0_7, %c0_8, %c0_9] : memref<8x1x16xi32, #tpu.memory_space<vmem>>, vector<1x1x16xi32>
    %8 = vector.shape_cast %7 : vector<1x1x16xi32> to vector<1x16xi32>
    %9 = vector.shape_cast %6 : vector<1x16xi32> to vector<1x1x16xi32>
    tpu.vector_store %arg4[%c0_7, %c0_8, %c0_9], %9 {strides = array<i32>} : memref<8x1x16xi32, #tpu.memory_space<vmem>>, vector<1x1x16xi32>,
    %c6 = arith.constant 6 : index
    %c0_10 = arith.constant 0 : index
    %c0_11 = arith.constant 0 : index
    %10 = vector.load %arg1[%c6, %c0_10, %c0_11] : memref<8x4x16xf32, #tpu.memory_space<vmem>>, vector<1x4x16xf32>
    %11 = vector.shape_cast %10 : vector<1x4x16xf32> to vector<4x16xf32>
    %c1 = arith.constant 1 : index
    %c0_12 = arith.constant 0 : index
    %c0_13 = arith.constant 0 : index
    %12 = vector.load %arg3[%c1, %c0_12, %c0_13] : memref<8x4x16xf32, #tpu.memory_space<vmem>>, vector<1x4x16xf32>
    %13 = vector.shape_cast %12 : vector<1x4x16xf32> to vector<4x16xf32>
    %14 = vector.shape_cast %11 : vector<4x16xf32> to vector<1x4x16xf32>
    tpu.vector_store %arg3[%c1, %c0_12, %c0_13], %14 {strides = array<i32>} : memref<8x4x16xf32, #tpu.memory_space<vmem>>, vector<1x4x16xf32>,
    %c6_14 = arith.constant 6 : index
    %c0_15 = arith.constant 0 : index
    %c0_16 = arith.constant 0 : index
    %15 = vector.load %arg2[%c6_14, %c0_15, %c0_16] : memref<8x1x16xi32, #tpu.memory_space<vmem>>, vector<1x1x16xi32>
    %16 = vector.shape_cast %15 : vector<1x1x16xi32> to vector<1x16xi32>
    %c1_17 = arith.constant 1 : index
    %c0_18 = arith.constant 0 : index
    %c0_19 = arith.constant 0 : index
    %17 = vector.load %arg4[%c1_17, %c0_18, %c0_19] : memref<8x1x16xi32, #tpu.memory_space<vmem>>, vector<1x1x16xi32>
    %18 = vector.shape_cast %17 : vector<1x1x16xi32> to vector<1x16xi32>
    %19 = vector.shape_cast %16 : vector<1x16xi32> to vector<1x1x16xi32>
    tpu.vector_store %arg4[%c1_17, %c0_18, %c0_19], %19 {strides = array<i32>} : memref<8x1x16xi32, #tpu.memory_space<vmem>>, vector<1x1x16xi32>,
    %c5 = arith.constant 5 : index
    %c0_20 = arith.constant 0 : index
    %c0_21 = arith.constant 0 : index
    %20 = vector.load %arg1[%c5, %c0_20, %c0_21] : memref<8x4x16xf32, #tpu.memory_space<vmem>>, vector<1x4x16xf32>
    %21 = vector.shape_cast %20 : vector<1x4x16xf32> to vector<4x16xf32>
    %c2 = arith.constant 2 : index
    %c0_22 = arith.constant 0 : index
    %c0_23 = arith.constant 0 : index
    %22 = vector.load %arg3[%c2, %c0_22, %c0_23] : memref<8x4x16xf32, #tpu.memory_space<vmem>>, vector<1x4x16xf32>
    %23 = vector.shape_cast %22 : vector<1x4x16xf32> to vector<4x16xf32>
    %24 = vector.shape_cast %21 : vector<4x16xf32> to vector<1x4x16xf32>
    tpu.vector_store %arg3[%c2, %c0_22, %c0_23], %24 {strides = array<i32>} : memref<8x4x16xf32, #tpu.memory_space<vmem>>, vector<1x4x16xf32>,
    %c5_24 = arith.constant 5 : index
    %c0_25 = arith.constant 0 : index
    %c0_26 = arith.constant 0 : index
    %25 = vector.load %arg2[%c5_24, %c0_25, %c0_26] : memref<8x1x16xi32, #tpu.memory_space<vmem>>, vector<1x1x16xi32>
    %26 = vector.shape_cast %25 : vector<1x1x16xi32> to vector<1x16xi32>
    %c2_27 = arith.constant 2 : index
    %c0_28 = arith.constant 0 : index
    %c0_29 = arith.constant 0 : index
    %27 = vector.load %arg4[%c2_27, %c0_28, %c0_29] : memref<8x1x16xi32, #tpu.memory_space<vmem>>, vector<1x1x16xi32>
    %28 = vector.shape_cast %27 : vector<1x1x16xi32> to vector<1x16xi32>
    %29 = vector.shape_cast %26 : vector<1x16xi32> to vector<1x1x16xi32>
    tpu.vector_store %arg4[%c2_27, %c0_28, %c0_29], %29 {strides = array<i32>} : memref<8x1x16xi32, #tpu.memory_space<vmem>>, vector<1x1x16xi32>,
    %c4 = arith.constant 4 : index
    %c0_30 = arith.constant 0 : index
    %c0_31 = arith.constant 0 : index
    %30 = vector.load %arg1[%c4, %c0_30, %c0_31] : memref<8x4x16xf32, #tpu.memory_space<vmem>>, vector<1x4x16xf32>
    %31 = vector.shape_cast %30 : vector<1x4x16xf32> to vector<4x16xf32>
    %c3 = arith.constant 3 : index
    %c0_32 = arith.constant 0 : index
    %c0_33 = arith.constant 0 : index
    %32 = vector.load %arg3[%c3, %c0_32, %c0_33] : memref<8x4x16xf32, #tpu.memory_space<vmem>>, vector<1x4x16xf32>
    %33 = vector.shape_cast %32 : vector<1x4x16xf32> to vector<4x16xf32>
    %34 = vector.shape_cast %31 : vector<4x16xf32> to vector<1x4x16xf32>
    tpu.vector_store %arg3[%c3, %c0_32, %c0_33], %34 {strides = array<i32>} : memref<8x4x16xf32, #tpu.memory_space<vmem>>, vector<1x4x16xf32>,
    %c4_34 = arith.constant 4 : index
    %c0_35 = arith.constant 0 : index
    %c0_36 = arith.constant 0 : index
    %35 = vector.load %arg2[%c4_34, %c0_35, %c0_36] : memref<8x1x16xi32, #tpu.memory_space<vmem>>, vector<1x1x16xi32>
    %36 = vector.shape_cast %35 : vector<1x1x16xi32> to vector<1x16xi32>
    %c3_37 = arith.constant 3 : index
    %c0_38 = arith.constant 0 : index
    %c0_39 = arith.constant 0 : index
    %37 = vector.load %arg4[%c3_37, %c0_38, %c0_39] : memref<8x1x16xi32, #tpu.memory_space<vmem>>, vector<1x1x16xi32>
    %38 = vector.shape_cast %37 : vector<1x1x16xi32> to vector<1x16xi32>
    %39 = vector.shape_cast %36 : vector<1x16xi32> to vector<1x1x16xi32>
    tpu.vector_store %arg4[%c3_37, %c0_38, %c0_39], %39 {strides = array<i32>} : memref<8x1x16xi32, #tpu.memory_space<vmem>>, vector<1x1x16xi32>,
    %c3_40 = arith.constant 3 : index
    %c0_41 = arith.constant 0 : index
    %c0_42 = arith.constant 0 : index
    %40 = vector.load %arg1[%c3_40, %c0_41, %c0_42] : memref<8x4x16xf32, #tpu.memory_space<vmem>>, vector<1x4x16xf32>
    %41 = vector.shape_cast %40 : vector<1x4x16xf32> to vector<4x16xf32>
    %c4_43 = arith.constant 4 : index
    %c0_44 = arith.constant 0 : index
    %c0_45 = arith.constant 0 : index
    %42 = vector.load %arg3[%c4_43, %c0_44, %c0_45] : memref<8x4x16xf32, #tpu.memory_space<vmem>>, vector<1x4x16xf32>
    %43 = vector.shape_cast %42 : vector<1x4x16xf32> to vector<4x16xf32>
    %44 = vector.shape_cast %41 : vector<4x16xf32> to vector<1x4x16xf32>
    tpu.vector_store %arg3[%c4_43, %c0_44, %c0_45], %44 {strides = array<i32>} : memref<8x4x16xf32, #tpu.memory_space<vmem>>, vector<1x4x16xf32>,
    %c3_46 = arith.constant 3 : index
    %c0_47 = arith.constant 0 : index
    %c0_48 = arith.constant 0 : index
    %45 = vector.load %arg2[%c3_46, %c0_47, %c0_48] : memref<8x1x16xi32, #tpu.memory_space<vmem>>, vector<1x1x16xi32>
    %46 = vector.shape_cast %45 : vector<1x1x16xi32> to vector<1x16xi32>
    %c4_49 = arith.constant 4 : index
    %c0_50 = arith.constant 0 : index
    %c0_51 = arith.constant 0 : index
    %47 = vector.load %arg4[%c4_49, %c0_50, %c0_51] : memref<8x1x16xi32, #tpu.memory_space<vmem>>, vector<1x1x16xi32>
    %48 = vector.shape_cast %47 : vector<1x1x16xi32> to vector<1x16xi32>
    %49 = vector.shape_cast %46 : vector<1x16xi32> to vector<1x1x16xi32>
    tpu.vector_store %arg4[%c4_49, %c0_50, %c0_51], %49 {strides = array<i32>} : memref<8x1x16xi32, #tpu.memory_space<vmem>>, vector<1x1x16xi32>,
    %c2_52 = arith.constant 2 : index
    %c0_53 = arith.constant 0 : index
    %c0_54 = arith.constant 0 : index
    %50 = vector.load %arg1[%c2_52, %c0_53, %c0_54] : memref<8x4x16xf32, #tpu.memory_space<vmem>>, vector<1x4x16xf32>
    %51 = vector.shape_cast %50 : vector<1x4x16xf32> to vector<4x16xf32>
    %c5_55 = arith.constant 5 : index
    %c0_56 = arith.constant 0 : index
    %c0_57 = arith.constant 0 : index
    %52 = vector.load %arg3[%c5_55, %c0_56, %c0_57] : memref<8x4x16xf32, #tpu.memory_space<vmem>>, vector<1x4x16xf32>
    %53 = vector.shape_cast %52 : vector<1x4x16xf32> to vector<4x16xf32>
    %54 = vector.shape_cast %51 : vector<4x16xf32> to vector<1x4x16xf32>
    tpu.vector_store %arg3[%c5_55, %c0_56, %c0_57], %54 {strides = array<i32>} : memref<8x4x16xf32, #tpu.memory_space<vmem>>, vector<1x4x16xf32>,
    %c2_58 = arith.constant 2 : index
    %c0_59 = arith.constant 0 : index
    %c0_60 = arith.constant 0 : index
    %55 = vector.load %arg2[%c2_58, %c0_59, %c0_60] : memref<8x1x16xi32, #tpu.memory_space<vmem>>, vector<1x1x16xi32>
    %56 = vector.shape_cast %55 : vector<1x1x16xi32> to vector<1x16xi32>
    %c5_61 = arith.constant 5 : index
    %c0_62 = arith.constant 0 : index
    %c0_63 = arith.constant 0 : index
    %57 = vector.load %arg4[%c5_61, %c0_62, %c0_63] : memref<8x1x16xi32, #tpu.memory_space<vmem>>, vector<1x1x16xi32>
    %58 = vector.shape_cast %57 : vector<1x1x16xi32> to vector<1x16xi32>
    %59 = vector.shape_cast %56 : vector<1x16xi32> to vector<1x1x16xi32>
    tpu.vector_store %arg4[%c5_61, %c0_62, %c0_63], %59 {strides = array<i32>} : memref<8x1x16xi32, #tpu.memory_space<vmem>>, vector<1x1x16xi32>,
    %c1_64 = arith.constant 1 : index
    %c0_65 = arith.constant 0 : index
    %c0_66 = arith.constant 0 : index
    %60 = vector.load %arg1[%c1_64, %c0_65, %c0_66] : memref<8x4x16xf32, #tpu.memory_space<vmem>>, vector<1x4x16xf32>
    %61 = vector.shape_cast %60 : vector<1x4x16xf32> to vector<4x16xf32>
    %c6_67 = arith.constant 6 : index
    %c0_68 = arith.constant 0 : index
    %c0_69 = arith.constant 0 : index
    %62 = vector.load %arg3[%c6_67, %c0_68, %c0_69] : memref<8x4x16xf32, #tpu.memory_space<vmem>>, vector<1x4x16xf32>
    %63 = vector.shape_cast %62 : vector<1x4x16xf32> to vector<4x16xf32>
    %64 = vector.shape_cast %61 : vector<4x16xf32> to vector<1x4x16xf32>
    tpu.vector_store %arg3[%c6_67, %c0_68, %c0_69], %64 {strides = array<i32>} : memref<8x4x16xf32, #tpu.memory_space<vmem>>, vector<1x4x16xf32>,
    %c1_70 = arith.constant 1 : index
    %c0_71 = arith.constant 0 : index
    %c0_72 = arith.constant 0 : index
    %65 = vector.load %arg2[%c1_70, %c0_71, %c0_72] : memref<8x1x16xi32, #tpu.memory_space<vmem>>, vector<1x1x16xi32>
    %66 = vector.shape_cast %65 : vector<1x1x16xi32> to vector<1x16xi32>
    %c6_73 = arith.constant 6 : index
    %c0_74 = arith.constant 0 : index
    %c0_75 = arith.constant 0 : index
    %67 = vector.load %arg4[%c6_73, %c0_74, %c0_75] : memref<8x1x16xi32, #tpu.memory_space<vmem>>, vector<1x1x16xi32>
    %68 = vector.shape_cast %67 : vector<1x1x16xi32> to vector<1x16xi32>
    %69 = vector.shape_cast %66 : vector<1x16xi32> to vector<1x1x16xi32>
    tpu.vector_store %arg4[%c6_73, %c0_74, %c0_75], %69 {strides = array<i32>} : memref<8x1x16xi32, #tpu.memory_space<vmem>>, vector<1x1x16xi32>,
    %c0_76 = arith.constant 0 : index
    %c0_77 = arith.constant 0 : index
    %c0_78 = arith.constant 0 : index
    %70 = vector.load %arg1[%c0_76, %c0_77, %c0_78] : memref<8x4x16xf32, #tpu.memory_space<vmem>>, vector<1x4x16xf32>
    %71 = vector.shape_cast %70 : vector<1x4x16xf32> to vector<4x16xf32>
    %c7_79 = arith.constant 7 : index
    %c0_80 = arith.constant 0 : index
    %c0_81 = arith.constant 0 : index
    %72 = vector.load %arg3[%c7_79, %c0_80, %c0_81] : memref<8x4x16xf32, #tpu.memory_space<vmem>>, vector<1x4x16xf32>
    %73 = vector.shape_cast %72 : vector<1x4x16xf32> to vector<4x16xf32>
    %74 = vector.shape_cast %71 : vector<4x16xf32> to vector<1x4x16xf32>
    tpu.vector_store %arg3[%c7_79, %c0_80, %c0_81], %74 {strides = array<i32>} : memref<8x4x16xf32, #tpu.memory_space<vmem>>, vector<1x4x16xf32>,
    %c0_82 = arith.constant 0 : index
    %c0_83 = arith.constant 0 : index
    %c0_84 = arith.constant 0 : index
    %75 = vector.load %arg2[%c0_82, %c0_83, %c0_84] : memref<8x1x16xi32, #tpu.memory_space<vmem>>, vector<1x1x16xi32>
    %76 = vector.shape_cast %75 : vector<1x1x16xi32> to vector<1x16xi32>
    %c7_85 = arith.constant 7 : index
    %c0_86 = arith.constant 0 : index
    %c0_87 = arith.constant 0 : index
    %77 = vector.load %arg4[%c7_85, %c0_86, %c0_87] : memref<8x1x16xi32, #tpu.memory_space<vmem>>, vector<1x1x16xi32>
    %78 = vector.shape_cast %77 : vector<1x1x16xi32> to vector<1x16xi32>
    %79 = vector.shape_cast %76 : vector<1x16xi32> to vector<1x1x16xi32>
    tpu.vector_store %arg4[%c7_85, %c0_86, %c0_87], %79 {strides = array<i32>} : memref<8x1x16xi32, #tpu.memory_space<vmem>>, vector<1x1x16xi32>,
    return
  }
  func.func @transform_0(%arg0: i32) -> (i32, i32, i32) {
    %c1_i32 = arith.constant 1 : i32
    %0 = arith.subi %c1_i32, %arg0 : i32
    %c0_i32 = arith.constant 0 : i32
    %c0_i32_0 = arith.constant 0 : i32
    %c0_i32_1 = arith.constant 0 : i32
    return %0, %c0_i32, %c0_i32_0 : i32, i32, i32
  }
  func.func @transform_1(%arg0: i32) -> (i32, i32, i32) {
    %c1_i32 = arith.constant 1 : i32
    %0 = arith.subi %c1_i32, %arg0 : i32
    %c0_i32 = arith.constant 0 : i32
    %c0_i32_0 = arith.constant 0 : i32
    %c0_i32_1 = arith.constant 0 : i32
    return %0, %c0_i32, %c0_i32_0 : i32, i32, i32
  }
  func.func @transform_2(%arg0: i32) -> (i32, i32, i32) {
    %c0_i32 = arith.constant 0 : i32
    %c0_i32_0 = arith.constant 0 : i32
    %c0_i32_1 = arith.constant 0 : i32
    return %arg0, %c0_i32, %c0_i32_0 : i32, i32, i32
  }
  func.func @transform_3(%arg0: i32) -> (i32, i32, i32) {
    %c0_i32 = arith.constant 0 : i32
    %c0_i32_0 = arith.constant 0 : i32
    %c0_i32_1 = arith.constant 0 : i32
    return %arg0, %c0_i32, %c0_i32_0 : i32, i32, i32
  }
}

</mosaic_0001>

<llo_original>
// kernel: tpu_custom_call.1
$region0: #{tpu_custom_call.1}
  #allocation0 [shape = 'u32[]', space=smem, size = 0x4, offset = 0x4, fixed_abs, tag = 'smem constant byte address 0x4 - core index']
  #allocation1 [shape = 'u32[144,128]{1,0:T(1,128)}', space=vmem, size = 0x12000, scoped, tag = 'internal scratch']
  %s0 = inlined_call_operand.hbm [shape: f32[16,4,16], index: 0, kind: input, shape index: {}]
  %s1 = inlined_call_operand.hbm [shape: s32[16,1,16], index: 1, kind: input, shape index: {}]
  %s2 = inlined_call_operand.hbm [shape: f32[16,4,16], index: 2, kind: output, shape index: {0}]
  %s3 = inlined_call_operand.hbm [shape: s32[16,1,16], index: 3, kind: output, shape index: {1}]
  %4 = xla_tuple %s2, %s3
  %s5 = sld [smem:[#allocation0]]
  $region57: #{tpu_custom_call.1} parent=0
    _
  %s7 = ssub.s32 1, %s5
  %s8 = scalar_select 0, %s7, %s5
  $region1: #{tpu_custom_call.1} parent=0
    #allocation2 [shape = 'u8[32768]{0}', space=vmem, size = 0x8000, scoped, tag = 'input window, operand 0']
    #allocation3 [shape = 's32[2]{0}', space=sflag, size = 0x8, scoped, tag = 'scoped memory for tpu_custom_call.1']
    #allocation4 [shape = 's32[2]{0}', space=sflag, size = 0x8, scoped, tag = 'scoped memory for tpu_custom_call.1']
    #allocation5 [shape = 'u8[8192]{0}', space=vmem, size = 0x2000, scoped, tag = 'input window, operand 1']
    #allocation6 [shape = 's32[2]{0}', space=sflag, size = 0x8, scoped, tag = 'scoped memory for tpu_custom_call.1']
    #allocation7 [shape = 'u8[32768]{0}', space=vmem, size = 0x8000, scoped, tag = 'output window, operand 0']
    #allocation8 [shape = 'u8[8192]{0}', space=vmem, size = 0x2000, scoped, tag = 'output window, operand 1']
    #allocation9 [shape = 's32[2]{0}', space=sflag, size = 0x8, scoped, tag = 'scoped memory for tpu_custom_call.1']
    %9 = vsyncpa [#allocation3], 0
    %s10 = scalar_lea.sflag [#allocation3], 1
    %11 = vsyncpa %s10, 0
    %12 = vsyncpa [#allocation6], 0
    %s13 = scalar_lea.sflag [#allocation6], 1
    %14 = vsyncpa %s13, 0
    %15 = vsyncpa [#allocation4], 0
    %s16 = scalar_lea.sflag [#allocation4], 1
    %17 = vsyncpa %s16, 0
    %18 = vsyncpa [#allocation9], 0
    %s19 = scalar_lea.sflag [#allocation9], 1
    %20 = vsyncpa %s19, 0
    loop: start=0, step=1, limit=4
    $region2: #{tpu_custom_call.1} parent=1 // loop_pre_header
      _
    $region3: #{tpu_custom_call.1} parent=1 // loop_header
      %s22 = sphi 0, %s26
      %p23 = scmp.ge.s32.totalorder %s22, 4
      %s34 = sphi 0, %s36
      %s37 = sphi 0, %s34
      %s38 = sphi 0, %s37
      %s54 = sphi 0, %s38
      %s62 = sphi 0, %s64
      %s65 = sphi 0, %s62
      %s66 = sphi 0, %s65
      %s82 = sphi 0, %s66
      %s88 = sphi 0, %s90
      %s91 = sphi 0, %s88
      %s92 = sphi 0, %s91
      %s108 = sphi 0, %s92
      %s114 = sphi 0, %s116
      %s117 = sphi 0, %s114
      %s118 = sphi 0, %s117
      %s134 = sphi 0, %s118
    $region4: #{tpu_custom_call.1} parent=1 // loop_header_branch
      %25 = sbr.rel (%p23) target = $region8
    $region5: #{tpu_custom_call.1} parent=1 // loop_body
      %s27 = ssub.s32 %s22, 1
      %s28 = ssub.s32 %s22, 2
      %s29 = sadd.s32 %s22, 1
      %s30 = ssub.s32 1, %s22
      %s31 = ssub.s32 1, %s29
      %s32 = ssub.s32 %s30, %s31
      %p33 = scmp.eq.s32.totalorder %s32, 0
      %s35 = sadd.s32 %s34, 1
      %s36 = scalar_select %p33, %s34, %s35
      %p39 = pneg %p33
      %p40 = scmp.eq.s32.totalorder %s22, 1
      %p41 = por %p39, %p40
      %p42 = scmp.ne.s32.totalorder %s34, %s37
      %p43 = scmp.eq.s32.totalorder %s22, 0
      %p44 = por %p42, %p43
      %p45 = scmp.ne.s32.totalorder %s34, %s37
      %p46 = scmp.eq.s32.totalorder %s27, 1
      %p47 = por %p45, %p46
      %p48 = scmp.ne.s32.totalorder %s37, %s38
      %p49 = scmp.eq.s32.totalorder %s27, 0
      %p50 = por %p48, %p49
      %p51 = scmp.ne.s32.totalorder %s37, %s38
      %p52 = scmp.eq.s32.totalorder %s28, 1
      %p53 = por %p51, %p52
      %p55 = scmp.ne.s32.totalorder %s38, %s54
      %p56 = scmp.eq.s32.totalorder %s28, 0
      %p57 = por %p55, %p56
      %s58 = ssub.s32 1, %s22
      %s59 = ssub.s32 1, %s29
      %s60 = ssub.s32 %s58, %s59
      %p61 = scmp.eq.s32.totalorder %s60, 0
      %s63 = sadd.s32 %s62, 1
      %s64 = scalar_select %p61, %s62, %s63
      %p67 = pneg %p61
      %p68 = scmp.eq.s32.totalorder %s22, 1
      %p69 = por %p67, %p68
      %p70 = scmp.ne.s32.totalorder %s62, %s65
      %p71 = scmp.eq.s32.totalorder %s22, 0
      %p72 = por %p70, %p71
      %p73 = scmp.ne.s32.totalorder %s62, %s65
      %p74 = scmp.eq.s32.totalorder %s27, 1
      %p75 = por %p73, %p74
      %p76 = scmp.ne.s32.totalorder %s65, %s66
      %p77 = scmp.eq.s32.totalorder %s27, 0
      %p78 = por %p76, %p77
      %p79 = scmp.ne.s32.totalorder %s65, %s66
      %p80 = scmp.eq.s32.totalorder %s28, 1
      %p81 = por %p79, %p80
      %p83 = scmp.ne.s32.totalorder %s66, %s82
      %p84 = scmp.eq.s32.totalorder %s28, 0
      %p85 = por %p83, %p84
      %s86 = ssub.s32 %s22, %s29
      %p87 = scmp.eq.s32.totalorder %s86, 0
      %s89 = sadd.s32 %s88, 1
      %s90 = scalar_select %p87, %s88, %s89
      %p93 = pneg %p87
      %p94 = scmp.eq.s32.totalorder %s22, 1
      %p95 = por %p93, %p94
      %p96 = scmp.ne.s32.totalorder %s88, %s91
      %p97 = scmp.eq.s32.totalorder %s22, 0
      %p98 = por %p96, %p97
      %p99 = scmp.ne.s32.totalorder %s88, %s91
      %p100 = scmp.eq.s32.totalorder %s27, 1
      %p101 = por %p99, %p100
      %p102 = scmp.ne.s32.totalorder %s91, %s92
      %p103 = scmp.eq.s32.totalorder %s27, 0
      %p104 = por %p102, %p103
      %p105 = scmp.ne.s32.totalorder %s91, %s92
      %p106 = scmp.eq.s32.totalorder %s28, 1
      %p107 = por %p105, %p106
      %p109 = scmp.ne.s32.totalorder %s92, %s108
      %p110 = scmp.eq.s32.totalorder %s28, 0
      %p111 = por %p109, %p110
      %s112 = ssub.s32 %s22, %s29
      %p113 = scmp.eq.s32.totalorder %s112, 0
      %s115 = sadd.s32 %s114, 1
      %s116 = scalar_select %p113, %s114, %s115
      %p119 = pneg %p113
      %p120 = scmp.eq.s32.totalorder %s22, 1
      %p121 = por %p119, %p120
      %p122 = scmp.ne.s32.totalorder %s114, %s117
      %p123 = scmp.eq.s32.totalorder %s22, 0
      %p124 = por %p122, %p123
      %p125 = scmp.ne.s32.totalorder %s114, %s117
      %p126 = scmp.eq.s32.totalorder %s27, 1
      %p127 = por %p125, %p126
      %p128 = scmp.ne.s32.totalorder %s117, %s118
      %p129 = scmp.eq.s32.totalorder %s27, 0
      %p130 = por %p128, %p129
      %p131 = scmp.ne.s32.totalorder %s117, %s118
      %p132 = scmp.eq.s32.totalorder %s28, 1
      %p133 = por %p131, %p132
      %p135 = scmp.ne.s32.totalorder %s118, %s134
      %p136 = scmp.eq.s32.totalorder %s28, 0
      %p137 = por %p135, %p136
      %p138 = scmp.le.s32.totalorder 1, %s22
      %p139 = scmp.lt.s32.totalorder %s22, 3
      %p140 = pnand %p138, %p139
      %p141 = pneg %p140
      // Predicated region
      $region9: #{tpu_custom_call.1} parent=5 // pred_check
        _
      $region10: #{tpu_custom_call.1} parent=5 // pred_check_branch
        %143 = sbr.rel (%p140) target = $region12
      $region11: #{tpu_custom_call.1} parent=5 // pred_region
        %s144 = ssub.s32 %s22, 1
      $region12: #{tpu_custom_call.1} parent=5 // pred_fallthru
        _
      %p145 = scmp.lt.s32.totalorder %s22, 2
      // Predicated region
      $region13: #{tpu_custom_call.1} parent=5 // pred_check
        %p146 = pneg %p145
      $region14: #{tpu_custom_call.1} parent=5 // pred_check_branch
        %148 = sbr.rel (%p146) target = $region16
      $region15: #{tpu_custom_call.1} parent=5 // pred_region
        // Predicated region
        $region17: #{tpu_custom_call.1} parent=15 // pred_check
          %p149 = pneg %p44
        $region18: #{tpu_custom_call.1} parent=15 // pred_check_branch
          %151 = sbr.rel (%p149) target = $region20
        $region19: #{tpu_custom_call.1} parent=15 // pred_region
          %s152 = sand.u32 %s34, 1
          %s153 = scalar_lea.sflag [#allocation3], %s152
          %s154 = sand.u32 %s34, 1
          %s155 = smul.addr %s154, 32
          %s156 = scalar_lea.vmem [#allocation2], %s155
          %s157 = ssub.s32 1, %s22
          %s158 = smul.u32 8, %s157
          %s160 = ssub.s32 512, 512
          %161 = vsyncadd %s153, %s160
          %s162 = smul.addr %s158, 64
          %s163 = scalar_lea.hbm %s0, %s162
          %s164 = sshll.u32 %s156, 4
          %s165 = int_to_ptr.vmem [resolvable:$true] %s164
          %170 = dma.hbm_to_vmem [thread:$0]  %s163, 512, %s165, %s153, 64, 64, 4
        $region20: #{tpu_custom_call.1} parent=15 // pred_fallthru
          _
        // Predicated region
        $region21: #{tpu_custom_call.1} parent=15 // pred_check
          %p171 = pneg %p72
        $region22: #{tpu_custom_call.1} parent=15 // pred_check_branch
          %173 = sbr.rel (%p171) target = $region24
        $region23: #{tpu_custom_call.1} parent=15 // pred_region
          %s174 = sand.u32 %s62, 1
          %s175 = scalar_lea.sflag [#allocation6], %s174
          %s176 = sand.u32 %s62, 1
          %s177 = smul.addr %s176, 8
          %s178 = scalar_lea.vmem [#allocation5], %s177
          %s179 = ssub.s32 1, %s22
          %s180 = smul.u32 8, %s179
          %s182 = ssub.s32 128, 128
          %183 = vsyncadd %s175, %s182
          %s184 = smul.addr %s180, 16
          %s185 = scalar_lea.hbm %s1, %s184
          %s186 = sshll.u32 %s178, 4
          %s187 = int_to_ptr.vmem [resolvable:$true] %s186
          %192 = dma.hbm_to_vmem [thread:$0]  %s185, 128, %s187, %s175, 16, 16, 1
        $region24: #{tpu_custom_call.1} parent=15 // pred_fallthru
          _
      $region16: #{tpu_custom_call.1} parent=5 // pred_fallthru
        _
      %p193 = scmp.le.s32.totalorder 1, %s22
      %p194 = scmp.lt.s32.totalorder %s22, 3
      %p195 = pnand %p193, %p194
      %p196 = pneg %p195
      // Predicated region
      $region25: #{tpu_custom_call.1} parent=5 // pred_check
        _
      $region26: #{tpu_custom_call.1} parent=5 // pred_check_branch
        %198 = sbr.rel (%p195) target = $region28
      $region27: #{tpu_custom_call.1} parent=5 // pred_region
        %s199 = ssub.s32 %s22, 1
        %s200 = sand.u32 %s37, 1
        %s201 = scalar_lea.sflag [#allocation3], %s200
        %s202 = sand.u32 %s37, 1
        %s203 = smul.addr %s202, 32
        %s204 = scalar_lea.vmem [#allocation2], %s203
        // Predicated region
        $region29: #{tpu_custom_call.1} parent=27 // pred_check
          %p205 = pneg %p50
        $region30: #{tpu_custom_call.1} parent=27 // pred_check_branch
          %207 = sbr.rel (%p205) target = $region32
        $region31: #{tpu_custom_call.1} parent=27 // pred_region
          %208 = dma.done %s201, 512
        $region32: #{tpu_custom_call.1} parent=27 // pred_fallthru
          _
        %s209 = sand.u32 %s65, 1
        %s210 = scalar_lea.sflag [#allocation6], %s209
        %s211 = sand.u32 %s65, 1
        %s212 = smul.addr %s211, 8
        %s213 = scalar_lea.vmem [#allocation5], %s212
        // Predicated region
        $region33: #{tpu_custom_call.1} parent=27 // pred_check
          %p214 = pneg %p78
        $region34: #{tpu_custom_call.1} parent=27 // pred_check_branch
          %216 = sbr.rel (%p214) target = $region36
        $region35: #{tpu_custom_call.1} parent=27 // pred_region
          %217 = dma.done %s210, 128
        $region36: #{tpu_custom_call.1} parent=27 // pred_fallthru
          _
        %s218 = sand.u32 %s37, 1
        %s219 = scalar_lea.sflag [#allocation3], %s218
        %s220 = sand.u32 %s37, 1
        %s221 = smul.addr %s220, 32
        %s222 = scalar_lea.vmem [#allocation2], %s221
        %p223 = pneg %p50
        %p224 = pneg %p47
        %s225 = sand.u32 %s65, 1
        %s226 = scalar_lea.sflag [#allocation6], %s225
        %s227 = sand.u32 %s65, 1
        %s228 = smul.addr %s227, 8
        %s229 = scalar_lea.vmem [#allocation5], %s228
        %p230 = pneg %p78
        %p231 = pneg %p75
        %p232 = pneg %p104
        %p233 = pneg %p101
        %s234 = sand.u32 %s91, 1
        %s235 = scalar_lea.sflag [#allocation4], %s234
        %s236 = sand.u32 %s91, 1
        %s237 = smul.addr %s236, 32
        %s238 = scalar_lea.vmem [#allocation7], %s237
        %p239 = pneg %p130
        %p240 = pneg %p127
        %s241 = sand.u32 %s117, 1
        %s242 = scalar_lea.sflag [#allocation9], %s241
        %s243 = sand.u32 %s117, 1
        %s244 = smul.addr %s243, 8
        %s245 = scalar_lea.vmem [#allocation8], %s244
        %s246 = ssub.s32 1, %s27
        %s247 = smul.u32 8, %s246
        %s248 = ssub.s32 1, %s27
        %s249 = smul.u32 8, %s248
        %s250 = smul.u32 8, %s27
        %s251 = smul.u32 8, %s27
        %s252 = scalar_lea.vmem %s204, 28 [#allocation2]
        %v253 = vld [vmem:[%s252] sm:$0xf]
        %vm254 = vcmask 125952
        %255 = vst.msk [vmem:[%s238] sm:$0xf] %vm254, %v253
        %s256 = scalar_lea.vmem %s213, 7 [#allocation5]
        %v257 = vld [vmem:[%s256] sm:$0x1]
        %vm258 = vcmask 122880
        %259 = vst.msk [vmem:[%s245] sm:$0x1] %vm258, %v257
        %s260 = scalar_lea.vmem %s204, 24 [#allocation2]
        %v261 = vld [vmem:[%s260] sm:$0xf]
        %s262 = scalar_lea.vmem %s238, 4 [#allocation7]
        %263 = vst.msk [vmem:[%s262] sm:$0xf] %vm254, %v261
        %s264 = scalar_lea.vmem %s213, 6 [#allocation5]
        %v265 = vld [vmem:[%s264] sm:$0x1]
        %s266 = scalar_lea.vmem %s245, 1 [#allocation8]
        %267 = vst.msk [vmem:[%s266] sm:$0x1] %vm258, %v265
        %s268 = scalar_lea.vmem %s204, 20 [#allocation2]
        %v269 = vld [vmem:[%s268] sm:$0xf]
        %s270 = scalar_lea.vmem %s238, 8 [#allocation7]
        %271 = vst.msk [vmem:[%s270] sm:$0xf] %vm254, %v269
        %s272 = scalar_lea.vmem %s213, 5 [#allocation5]
        %v273 = vld [vmem:[%s272] sm:$0x1]
        %s274 = scalar_lea.vmem %s245, 2 [#allocation8]
        %275 = vst.msk [vmem:[%s274] sm:$0x1] %vm258, %v273
        %s276 = scalar_lea.vmem %s204, 16 [#allocation2]
        %v277 = vld [vmem:[%s276] sm:$0xf]
        %s278 = scalar_lea.vmem %s238, 12 [#allocation7]
        %279 = vst.msk [vmem:[%s278] sm:$0xf] %vm254, %v277
        %s280 = scalar_lea.vmem %s213, 4 [#allocation5]
        %v281 = vld [vmem:[%s280] sm:$0x1]
        %s282 = scalar_lea.vmem %s245, 3 [#allocation8]
        %283 = vst.msk [vmem:[%s282] sm:$0x1] %vm258, %v281
        %s284 = scalar_lea.vmem %s204, 12 [#allocation2]
        %v285 = vld [vmem:[%s284] sm:$0xf]
        %s286 = scalar_lea.vmem %s238, 16 [#allocation7]
        %287 = vst.msk [vmem:[%s286] sm:$0xf] %vm254, %v285
        %s288 = scalar_lea.vmem %s213, 3 [#allocation5]
        %v289 = vld [vmem:[%s288] sm:$0x1]
        %s290 = scalar_lea.vmem %s245, 4 [#allocation8]
        %291 = vst.msk [vmem:[%s290] sm:$0x1] %vm258, %v289
        %s292 = scalar_lea.vmem %s204, 8 [#allocation2]
        %v293 = vld [vmem:[%s292] sm:$0xf]
        %s294 = scalar_lea.vmem %s238, 20 [#allocation7]
        %295 = vst.msk [vmem:[%s294] sm:$0xf] %vm254, %v293
        %s296 = scalar_lea.vmem %s213, 2 [#allocation5]
        %v297 = vld [vmem:[%s296] sm:$0x1]
        %s298 = scalar_lea.vmem %s245, 5 [#allocation8]
        %299 = vst.msk [vmem:[%s298] sm:$0x1] %vm258, %v297
        %s300 = scalar_lea.vmem %s204, 4 [#allocation2]
        %v301 = vld [vmem:[%s300] sm:$0xf]
        %s302 = scalar_lea.vmem %s238, 24 [#allocation7]
        %303 = vst.msk [vmem:[%s302] sm:$0xf] %vm254, %v301
        %s304 = scalar_lea.vmem %s213, 1 [#allocation5]
        %v305 = vld [vmem:[%s304] sm:$0x1]
        %s306 = scalar_lea.vmem %s245, 6 [#allocation8]
        %307 = vst.msk [vmem:[%s306] sm:$0x1] %vm258, %v305
        %v308 = vld [vmem:[%s204] sm:$0xf]
        %s309 = scalar_lea.vmem %s238, 28 [#allocation7]
        %310 = vst.msk [vmem:[%s309] sm:$0xf] %vm254, %v308
        %v311 = vld [vmem:[%s213] sm:$0x1]
        %s312 = scalar_lea.vmem %s245, 7 [#allocation8]
        %313 = vst.msk [vmem:[%s312] sm:$0x1] %vm258, %v311
        %s314 = sand.u32 %s91, 1
        %s315 = scalar_lea.sflag [#allocation4], %s314
        %s316 = sand.u32 %s91, 1
        %s317 = smul.addr %s316, 32
        %s318 = scalar_lea.vmem [#allocation7], %s317
        %s319 = sand.u32 %s117, 1
        %s320 = scalar_lea.sflag [#allocation9], %s319
        %s321 = sand.u32 %s117, 1
        %s322 = smul.addr %s321, 8
        %s323 = scalar_lea.vmem [#allocation8], %s322
        // Predicated region
        $region37: #{tpu_custom_call.1} parent=27 // pred_check
          %p324 = pneg %p101
        $region38: #{tpu_custom_call.1} parent=27 // pred_check_branch
          %326 = sbr.rel (%p324) target = $region40
        $region39: #{tpu_custom_call.1} parent=27 // pred_region
          %s327 = smul.u32 8, %s27
          %s329 = ssub.s32 512, 512
          %330 = vsyncadd %s315, %s329
          %s331 = smul.addr %s327, 64
          %s332 = scalar_lea.hbm %s2, %s331
          %s333 = sshll.u32 %s318, 4
          %s334 = int_to_ptr.vmem [resolvable:$true] %s333
          %339 = dma.vmem_to_hbm [thread:$0]  %s334, 512, %s332, %s315, 64, 64, 4
        $region40: #{tpu_custom_call.1} parent=27 // pred_fallthru
          _
        // Predicated region
        $region41: #{tpu_custom_call.1} parent=27 // pred_check
          %p340 = pneg %p127
        $region42: #{tpu_custom_call.1} parent=27 // pred_check_branch
          %342 = sbr.rel (%p340) target = $region44
        $region43: #{tpu_custom_call.1} parent=27 // pred_region
          %s343 = smul.u32 8, %s27
          %s345 = ssub.s32 128, 128
          %346 = vsyncadd %s320, %s345
          %s347 = smul.addr %s343, 16
          %s348 = scalar_lea.hbm %s3, %s347
          %s349 = sshll.u32 %s323, 4
          %s350 = int_to_ptr.vmem [resolvable:$true] %s349
          %355 = dma.vmem_to_hbm [thread:$0]  %s350, 128, %s348, %s320, 16, 16, 1
        $region44: #{tpu_custom_call.1} parent=27 // pred_fallthru
          _
      $region28: #{tpu_custom_call.1} parent=5 // pred_fallthru
        _
      %p356 = scmp.le.s32.totalorder 2, %s22
      // Predicated region
      $region45: #{tpu_custom_call.1} parent=5 // pred_check
        %p357 = pneg %p356
      $region46: #{tpu_custom_call.1} parent=5 // pred_check_branch
        %359 = sbr.rel (%p357) target = $region48
      $region47: #{tpu_custom_call.1} parent=5 // pred_region
        %s360 = ssub.s32 %s22, 2
        // Predicated region
        $region49: #{tpu_custom_call.1} parent=47 // pred_check
          %p361 = pneg %p107
        $region50: #{tpu_custom_call.1} parent=47 // pred_check_branch
          %363 = sbr.rel (%p361) target = $region52
        $region51: #{tpu_custom_call.1} parent=47 // pred_region
          %s364 = sand.u32 %s92, 1
          %s365 = scalar_lea.sflag [#allocation4], %s364
          %s366 = sand.u32 %s92, 1
          %s367 = smul.addr %s366, 32
          %s368 = scalar_lea.vmem [#allocation7], %s367
          %369 = dma.done %s365, 512
        $region52: #{tpu_custom_call.1} parent=47 // pred_fallthru
          _
        // Predicated region
        $region53: #{tpu_custom_call.1} parent=47 // pred_check
          %p370 = pneg %p133
        $region54: #{tpu_custom_call.1} parent=47 // pred_check_branch
          %372 = sbr.rel (%p370) target = $region56
        $region55: #{tpu_custom_call.1} parent=47 // pred_region
          %s373 = sand.u32 %s118, 1
          %s374 = scalar_lea.sflag [#allocation9], %s373
          %s375 = sand.u32 %s118, 1
          %s376 = smul.addr %s375, 8
          %s377 = scalar_lea.vmem [#allocation8], %s376
          %378 = dma.done %s374, 128
        $region56: #{tpu_custom_call.1} parent=47 // pred_fallthru
          _
      $region48: #{tpu_custom_call.1} parent=5 // pred_fallthru
        _
    $region6: #{tpu_custom_call.1} parent=1 // loop_footer
      %s26 = sadd.s32 1, %s22
    $region7: #{tpu_custom_call.1} parent=1 // loop_footer_branch
      %21 = sbr.rel target = $region3
    $region8: #{tpu_custom_call.1} parent=1 // loop_exit
      _
    %379 = vsyncpa [#allocation3], 1
    %s380 = scalar_lea.sflag [#allocation3], 1
    %381 = vsyncpa %s380, 1
    %382 = vsyncpa [#allocation6], 1
    %s383 = scalar_lea.sflag [#allocation6], 1
    %384 = vsyncpa %s383, 1
    %385 = vsyncpa [#allocation4], 1
    %s386 = scalar_lea.sflag [#allocation4], 1
    %387 = vsyncpa %s386, 1
    %388 = vsyncpa [#allocation9], 1
    %s389 = scalar_lea.sflag [#allocation9], 1
    %390 = vsyncpa %s389, 1

</llo_original>
